<compile_context>
chip_gen: v5e
topology: v5e:2x2
jax: 0.10.0
libtpu: 0.0.40
codegen_flags: <defaults>
</compile_context>

<pallas_src>
import math
import jax
import jax.numpy as jnp
from jax.experimental import pallas as pl
from jax.experimental.pallas import tpu as pltpu

BATCH = 2
SEQ = 8
HIDDEN = 32
N_HEADS = 4
HEAD_DIM = HIDDEN // N_HEADS
LN_EPS = 1e-5  # PyTorch nn.LayerNorm default


def attention_kernel(x_ref, wqkv_ref, bqkv_ref, mask_ref, wo_ref, bo_ref,
                     gamma_ref, beta_ref, o_ref):
    """One grid step = one batch element: x_ref is the (S, H) slab for batch b."""
    S, H, NH = SEQ, HIDDEN, N_HEADS
    x = x_ref[...]                                                        # (S, H) f32

    # --- fused Q/K/V projection: one wide MXU matmul + one packed bias add ---
    # (1/sqrt(D) is already folded into the Q columns of wqkv/bqkv on the host.)
    qkv = jnp.dot(x, wqkv_ref[...],
                  preferred_element_type=jnp.float32) + bqkv_ref[...]     # (S, 3H)
    q = qkv[:, :H]                                                        # scaled Q
    k = qkv[:, H:2 * H]
    v = qkv[:, 2 * H:3 * H]

    # --- block-diagonal "concatenated head" attention (no per-head loop / stack) ---
    # mask[h*S + t, h'*D + d] = 1 iff h == h'  (precomputed constant input).
    mask = mask_ref[...]                                                  # (NH*S, H)
    k_exp = jnp.concatenate([k] * NH, axis=0) * mask                      # (NH*S, H)
    v_exp = jnp.concatenate([v] * NH, axis=0) * mask                      # (NH*S, H)

    # scores[q, h*S + t] = q_h(q) . k_h(t)   -- all heads in ONE MXU matmul
    scores = jax.lax.dot_general(q, k_exp, (((1,), (1,)), ((), ())),
                                 preferred_element_type=jnp.float32)      # (S, NH*S)

    # Row-global max is a valid (constant-per-row) stabilizer for every head's softmax.
    m = jnp.max(scores, axis=-1, keepdims=True)
    p = jnp.exp(scores - m)                                               # (S, NH*S)

    # attn_un[q, h*D + d] = sum_t p[q, h*S+t] * v[t, h*D+d]   (one matmul)
    attn_un = jnp.dot(p, v_exp, preferred_element_type=jnp.float32)       # (S, H)
    # denom[q, h*D + d] = sum_t p[q, h*S+t]  (per-head sums broadcast over D; one matmul)
    denom = jnp.dot(p, mask, preferred_element_type=jnp.float32)          # (S, H)
    attn = attn_un / denom   # exact division (parity with the PyTorch reference)

    # --- output projection: single (S,H) x (H,H) matmul (no head-batched weights) ---
    out = jnp.dot(attn, wo_ref[...],
                  preferred_element_type=jnp.float32) + bo_ref[...]       # (S, H)

    # --- residual + LayerNorm ---
    y = out + x
    mean = jnp.mean(y, axis=-1, keepdims=True)
    yc = y - mean
    var = jnp.mean(yc * yc, axis=-1, keepdims=True)
    y_norm = yc * jax.lax.rsqrt(var + LN_EPS)
    o_ref[...] = (y_norm * gamma_ref[...] + beta_ref[...]).astype(o_ref.dtype)


def pack_params(params):
    """Host-side, one-time weight packing (kept OUTSIDE the jitted forward)."""
    scale = 1.0 / math.sqrt(HEAD_DIM)
    wqkv = jnp.concatenate([params["wq"] * scale, params["wk"], params["wv"]], axis=1)
    bqkv = jnp.concatenate([params["bq"] * scale, params["bk"], params["bv"]], axis=1)
    # Head-matching mask for the block-diagonal attention trick.
    row = jnp.arange(N_HEADS * SEQ)[:, None] // SEQ
    col = jnp.arange(HIDDEN)[None, :] // HEAD_DIM
    head_mask = (row == col).astype(jnp.float32)                          # (NH*S, H)
    return dict(wqkv=wqkv, bqkv=bqkv, head_mask=head_mask,
                wo=params["wo"], bo=params["bo"],
                gamma=params["gamma"], beta=params["beta"])


@jax.jit
def attention_forward(x, packed):
    B, S, H = x.shape
    x2d = x.reshape(B * S, H)

    out2d = pl.pallas_call(
        attention_kernel,
        out_shape=jax.ShapeDtypeStruct((B * S, H), x.dtype),
        grid=(B,),
        in_specs=[
            pl.BlockSpec((S, H), lambda b: (b, 0)),                 # x (per-batch slab)
            pl.BlockSpec((H, 3 * H), lambda b: (0, 0)),             # wqkv
            pl.BlockSpec((1, 3 * H), lambda b: (0, 0)),             # bqkv
            pl.BlockSpec((N_HEADS * S, H), lambda b: (0, 0)),       # head mask
            pl.BlockSpec((H, H), lambda b: (0, 0)),                 # wo
            pl.BlockSpec((1, H), lambda b: (0, 0)),                 # bo
            pl.BlockSpec((1, H), lambda b: (0, 0)),                 # gamma
            pl.BlockSpec((1, H), lambda b: (0, 0)),                 # beta
        ],
        out_specs=pl.BlockSpec((S, H), lambda b: (b, 0)),
        compiler_params=pltpu.CompilerParams(
            dimension_semantics=("parallel",)),
    )(x2d, packed["wqkv"], packed["bqkv"], packed["head_mask"],
      packed["wo"], packed["bo"], packed["gamma"], packed["beta"])
    return out2d.reshape(B, S, H)


def init_params(key, hidden):
    keys = jax.random.split(key, 8)
    s = 1.0 / math.sqrt(hidden)

    def lin(kw, kb):
        w = jax.random.uniform(kw, (hidden, hidden), jnp.float32, -s, s)
        b = jax.random.uniform(kb, (1, hidden), jnp.float32, -s, s)
        return w, b

    wq, bq = lin(keys[0], keys[1])
    wk, bk = lin(keys[2], keys[3])
    wv, bv = lin(keys[4], keys[5])
    wo, bo = lin(keys[6], keys[7])
    return dict(wq=wq, bq=bq, wk=wk, bk=bk, wv=wv, bv=bv, wo=wo, bo=bo,
                gamma=jnp.ones((1, hidden), jnp.float32),
                beta=jnp.zeros((1, hidden), jnp.float32))


def reference_forward(x, p):
    """Plain-JAX reference matching the PyTorch module (eval mode)."""
    B, S, H = x.shape
    q = x @ p["wq"] + p["bq"]
    k = x @ p["wk"] + p["bk"]
    v = x @ p["wv"] + p["bv"]

    def split(t):  # (B,S,H) -> (B, nh, S, d)
        return t.reshape(B, S, N_HEADS, HEAD_DIM).transpose(0, 2, 1, 3)

    qh, kh, vh = split(q), split(k), split(v)
    scores = jnp.einsum("bhqd,bhkd->bhqk", qh, kh) / math.sqrt(HEAD_DIM)
    probs = jax.nn.softmax(scores, axis=-1)
    attn = jnp.einsum("bhqk,bhkd->bhqd", probs, vh)
    attn = attn.transpose(0, 2, 1, 3).reshape(B, S, H)
    out = attn @ p["wo"] + p["bo"]
    y = out + x
    mean = jnp.mean(y, axis=-1, keepdims=True)
    var = jnp.mean((y - mean) ** 2, axis=-1, keepdims=True)
    return (y - mean) * jax.lax.rsqrt(var + LN_EPS) * p["gamma"] + p["beta"]


if __name__ == "__main__":
    key = jax.random.PRNGKey(0)
    k_x, k_p = jax.random.split(key)
    x = jax.random.normal(k_x, (BATCH, SEQ, HIDDEN), jnp.float32)
    params = init_params(k_p, HIDDEN)
    packed = pack_params(params)          # one-time packing, outside the jitted forward

    out = attention_forward(x, packed)
    out = jax.block_until_ready(out)

    ref = reference_forward(x, params)
    assert out.shape == (BATCH, SEQ, HIDDEN)
    assert jnp.allclose(out, ref, atol=1e-4, rtol=1e-4), "mismatch vs reference"
    print("KERNEL_OK")
</pallas_src>

<mosaic_0001>
module attributes {stable_mosaic.version = 11 : i64} {
  func.func @attention_kernel(%arg0: i32, %arg1: memref<8x32xf32, #tpu.memory_space<vmem>>, %arg2: memref<32x96xf32, #tpu.memory_space<vmem>>, %arg3: memref<1x96xf32, #tpu.memory_space<vmem>>, %arg4: memref<32x32xf32, #tpu.memory_space<vmem>>, %arg5: memref<32x32xf32, #tpu.memory_space<vmem>>, %arg6: memref<1x32xf32, #tpu.memory_space<vmem>>, %arg7: memref<1x32xf32, #tpu.memory_space<vmem>>, %arg8: memref<1x32xf32, #tpu.memory_space<vmem>>, %arg9: memref<8x32xf32, #tpu.memory_space<vmem>>) attributes {dimension_semantics = [#tpu.dimension_semantics<parallel>], iteration_bounds = array<i64: 2>, scalar_prefetch = 0 : i64, scratch_operands = 0 : i64, tpu.core_type = #tpu.core_type<tc>, window_params = [{transform_indices = @transform_0, window_bounds = array<i64: 8, 32>}, {pipeline_mode = #tpu.pipeline_mode<synchronous>, transform_indices = @transform_1, window_bounds = array<i64: 32, 96>}, {pipeline_mode = #tpu.pipeline_mode<synchronous>, transform_indices = @transform_2, window_bounds = array<i64: 1, 96>}, {pipeline_mode = #tpu.pipeline_mode<synchronous>, transform_indices = @transform_3, window_bounds = array<i64: 32, 32>}, {pipeline_mode = #tpu.pipeline_mode<synchronous>, transform_indices = @transform_4, window_bounds = array<i64: 32, 32>}, {pipeline_mode = #tpu.pipeline_mode<synchronous>, transform_indices = @transform_5, window_bounds = array<i64: 1, 32>}, {pipeline_mode = #tpu.pipeline_mode<synchronous>, transform_indices = @transform_6, window_bounds = array<i64: 1, 32>}, {pipeline_mode = #tpu.pipeline_mode<synchronous>, transform_indices = @transform_7, window_bounds = array<i64: 1, 32>}, {transform_indices = @transform_8, window_bounds = array<i64: 8, 32>}]} {
    %c0 = arith.constant 0 : index
    %c0_0 = arith.constant 0 : index
    %0 = vector.load %arg1[%c0, %c0_0] : memref<8x32xf32, #tpu.memory_space<vmem>>, vector<8x32xf32>
    %c0_1 = arith.constant 0 : index
    %c0_2 = arith.constant 0 : index
    %1 = vector.load %arg2[%c0_1, %c0_2] : memref<32x96xf32, #tpu.memory_space<vmem>>, vector<32x96xf32>
    %cst = arith.constant dense<0.000000e+00> : vector<8x96xf32>
    %2 = tpu.matmul %0, %1, %cst {dimension_numbers = #tpu.dot_dimension_numbers<[1], [0], [0], [1], [0, 0, 1, 1], [], []>} : vector<8x32xf32>, vector<32x96xf32>, vector<8x96xf32> -> vector<8x96xf32>
    %c0_3 = arith.constant 0 : index
    %c0_4 = arith.constant 0 : index
    %3 = vector.load %arg3[%c0_3, %c0_4] : memref<1x96xf32, #tpu.memory_space<vmem>>, vector<1x96xf32>
    %4 = vector.broadcast %3 : vector<1x96xf32> to vector<8x96xf32>
    %5 = arith.addf %2, %4 : vector<8x96xf32>
    %6 = vector.extract_strided_slice %5 {offsets = [0, 0], sizes = [8, 32], strides = [1, 1]} : vector<8x96xf32> to vector<8x32xf32>
    %7 = vector.extract_strided_slice %5 {offsets = [0, 32], sizes = [8, 32], strides = [1, 1]} : vector<8x96xf32> to vector<8x32xf32>
    %8 = vector.extract_strided_slice %5 {offsets = [0, 64], sizes = [8, 32], strides = [1, 1]} : vector<8x96xf32> to vector<8x32xf32>
    %c0_5 = arith.constant 0 : index
    %c0_6 = arith.constant 0 : index
    %9 = vector.load %arg4[%c0_5, %c0_6] : memref<32x32xf32, #tpu.memory_space<vmem>>, vector<32x32xf32>
    %10 = tpu.concatenate %7, %7, %7, %7 in 0 : vector<8x32xf32>, vector<8x32xf32>, vector<8x32xf32>, vector<8x32xf32> -> vector<32x32xf32>
    %11 = arith.mulf %10, %9 : vector<32x32xf32>
    %12 = tpu.concatenate %8, %8, %8, %8 in 0 : vector<8x32xf32>, vector<8x32xf32>, vector<8x32xf32>, vector<8x32xf32> -> vector<32x32xf32>
    %13 = arith.mulf %12, %9 : vector<32x32xf32>
    %cst_7 = arith.constant dense<0.000000e+00> : vector<8x32xf32>
    %14 = tpu.matmul %6, %11, %cst_7 {dimension_numbers = #tpu.dot_dimension_numbers<[1], [1], [0], [0], [0, 0, 1, 0], [], []>} : vector<8x32xf32>, vector<32x32xf32>, vector<8x32xf32> -> vector<8x32xf32>
    %cst_8 = arith.constant dense<0xFF800000> : vector<8xf32>
    %15 = vector.multi_reduction <maximumf>, %14, %cst_8 [1] : vector<8x32xf32> to vector<8xf32>
    %16 = vector.shape_cast %15 : vector<8xf32> to vector<8x1xf32>
    %17 = vector.broadcast %16 : vector<8x1xf32> to vector<8x32xf32>
    %18 = arith.subf %14, %17 : vector<8x32xf32>
    %19 = math.exp %18 : vector<8x32xf32>
    %cst_9 = arith.constant dense<0.000000e+00> : vector<8x32xf32>
    %20 = tpu.matmul %19, %13, %cst_9 {dimension_numbers = #tpu.dot_dimension_numbers<[1], [0], [0], [1], [0, 0, 1, 1], [], []>} : vector<8x32xf32>, vector<32x32xf32>, vector<8x32xf32> -> vector<8x32xf32>
    %cst_10 = arith.constant dense<0.000000e+00> : vector<8x32xf32>
    %21 = tpu.matmul %19, %9, %cst_10 {dimension_numbers = #tpu.dot_dimension_numbers<[1], [0], [0], [1], [0, 0, 1, 1], [], []>} : vector<8x32xf32>, vector<32x32xf32>, vector<8x32xf32> -> vector<8x32xf32>
    %22 = arith.divf %20, %21 : vector<8x32xf32>
    %c0_11 = arith.constant 0 : index
    %c0_12 = arith.constant 0 : index
    %23 = vector.load %arg5[%c0_11, %c0_12] : memref<32x32xf32, #tpu.memory_space<vmem>>, vector<32x32xf32>
    %cst_13 = arith.constant dense<0.000000e+00> : vector<8x32xf32>
    %24 = tpu.matmul %22, %23, %cst_13 {dimension_numbers = #tpu.dot_dimension_numbers<[1], [0], [0], [1], [0, 0, 1, 1], [], []>} : vector<8x32xf32>, vector<32x32xf32>, vector<8x32xf32> -> vector<8x32xf32>
    %c0_14 = arith.constant 0 : index
    %c0_15 = arith.constant 0 : index
    %25 = vector.load %arg6[%c0_14, %c0_15] : memref<1x32xf32, #tpu.memory_space<vmem>>, vector<1x32xf32>
    %26 = vector.broadcast %25 : vector<1x32xf32> to vector<8x32xf32>
    %27 = arith.addf %24, %26 : vector<8x32xf32>
    %28 = arith.addf %27, %0 : vector<8x32xf32>
    %cst_16 = arith.constant dense<0.000000e+00> : vector<8xf32>
    %29 = vector.multi_reduction <add>, %28, %cst_16 [1] : vector<8x32xf32> to vector<8xf32>
    %30 = vector.shape_cast %29 : vector<8xf32> to vector<8x1xf32>
    %cst_17 = arith.constant 3.200000e+01 : f32
    %31 = vector.broadcast %cst_17 : f32 to vector<8x1xf32>
    %32 = arith.divf %30, %31 : vector<8x1xf32>
    %33 = vector.broadcast %32 : vector<8x1xf32> to vector<8x32xf32>
    %34 = arith.subf %28, %33 : vector<8x32xf32>
    %35 = arith.mulf %34, %34 : vector<8x32xf32>
    %cst_18 = arith.constant dense<0.000000e+00> : vector<8xf32>
    %36 = vector.multi_reduction <add>, %35, %cst_18 [1] : vector<8x32xf32> to vector<8xf32>
    %37 = vector.shape_cast %36 : vector<8xf32> to vector<8x1xf32>
    %cst_19 = arith.constant 3.200000e+01 : f32
    %38 = vector.broadcast %cst_19 : f32 to vector<8x1xf32>
    %39 = arith.divf %37, %38 : vector<8x1xf32>
    %cst_20 = arith.constant 9.99999974E-6 : f32
    %40 = vector.broadcast %cst_20 : f32 to vector<8x1xf32>
    %41 = arith.addf %39, %40 : vector<8x1xf32>
    %42 = math.rsqrt %41 : vector<8x1xf32>
    %43 = vector.broadcast %42 : vector<8x1xf32> to vector<8x32xf32>
    %44 = arith.mulf %34, %43 : vector<8x32xf32>
    %c0_21 = arith.constant 0 : index
    %c0_22 = arith.constant 0 : index
    %45 = vector.load %arg7[%c0_21, %c0_22] : memref<1x32xf32, #tpu.memory_space<vmem>>, vector<1x32xf32>
    %46 = vector.broadcast %45 : vector<1x32xf32> to vector<8x32xf32>
    %47 = arith.mulf %44, %46 : vector<8x32xf32>
    %c0_23 = arith.constant 0 : index
    %c0_24 = arith.constant 0 : index
    %48 = vector.load %arg8[%c0_23, %c0_24] : memref<1x32xf32, #tpu.memory_space<vmem>>, vector<1x32xf32>
    %49 = vector.broadcast %48 : vector<1x32xf32> to vector<8x32xf32>
    %50 = arith.addf %47, %49 : vector<8x32xf32>
    %c0_25 = arith.constant 0 : index
    %c0_26 = arith.constant 0 : index
    %51 = vector.load %arg9[%c0_25, %c0_26] : memref<8x32xf32, #tpu.memory_space<vmem>>, vector<8x32xf32>
    tpu.vector_store %arg9[%c0_25, %c0_26], %50 {strides = array<i32>} : memref<8x32xf32, #tpu.memory_space<vmem>>, vector<8x32xf32>,
    return
  }
  func.func @transform_0(%arg0: i32) -> (i32, i32) {
    %c0_i32 = arith.constant 0 : i32
    %c0_i32_0 = arith.constant 0 : i32
    return %arg0, %c0_i32 : i32, i32
  }
  func.func @transform_1(%arg0: i32) -> (i32, i32) {
    %c0_i32 = arith.constant 0 : i32
    %c0_i32_0 = arith.constant 0 : i32
    %c0_i32_1 = arith.constant 0 : i32
    return %c0_i32, %c0_i32_0 : i32, i32
  }
  func.func @transform_2(%arg0: i32) -> (i32, i32) {
    %c0_i32 = arith.constant 0 : i32
    %c0_i32_0 = arith.constant 0 : i32
    %c0_i32_1 = arith.constant 0 : i32
    return %c0_i32, %c0_i32_0 : i32, i32
  }
  func.func @transform_3(%arg0: i32) -> (i32, i32) {
    %c0_i32 = arith.constant 0 : i32
    %c0_i32_0 = arith.constant 0 : i32
    %c0_i32_1 = arith.constant 0 : i32
    return %c0_i32, %c0_i32_0 : i32, i32
  }
  func.func @transform_4(%arg0: i32) -> (i32, i32) {
    %c0_i32 = arith.constant 0 : i32
    %c0_i32_0 = arith.constant 0 : i32
    %c0_i32_1 = arith.constant 0 : i32
    return %c0_i32, %c0_i32_0 : i32, i32
  }
  func.func @transform_5(%arg0: i32) -> (i32, i32) {
    %c0_i32 = arith.constant 0 : i32
    %c0_i32_0 = arith.constant 0 : i32
    %c0_i32_1 = arith.constant 0 : i32
    return %c0_i32, %c0_i32_0 : i32, i32
  }
  func.func @transform_6(%arg0: i32) -> (i32, i32) {
    %c0_i32 = arith.constant 0 : i32
    %c0_i32_0 = arith.constant 0 : i32
    %c0_i32_1 = arith.constant 0 : i32
    return %c0_i32, %c0_i32_0 : i32, i32
  }
  func.func @transform_7(%arg0: i32) -> (i32, i32) {
    %c0_i32 = arith.constant 0 : i32
    %c0_i32_0 = arith.constant 0 : i32
    %c0_i32_1 = arith.constant 0 : i32
    return %c0_i32, %c0_i32_0 : i32, i32
  }
  func.func @transform_8(%arg0: i32) -> (i32, i32) {
    %c0_i32 = arith.constant 0 : i32
    %c0_i32_0 = arith.constant 0 : i32
    return %arg0, %c0_i32 : i32, i32
  }
}

</mosaic_0001>

<llo_original>
// kernel: attention_forward.1
$region0: #{attention_forward.1}
  #allocation0 [shape = 'u32[]', space=smem, size = 0x4, offset = 0x4, fixed_abs, tag = 'smem constant byte address 0x4 - core index']
  #allocation1 [shape = 'u32[72,128]{1,0:T(1,128)}', space=vmem, size = 0x9000, scoped, tag = 'internal scratch']
  %s0 = inlined_call_operand.hbm [shape: f32[16,32], index: 0, kind: input, shape index: {}]
  %s1 = inlined_call_operand.hbm [shape: f32[32,96], index: 1, kind: input, shape index: {}]
  %s2 = inlined_call_operand.vmem [shape: f32[1,96], index: 2, kind: input, shape index: {}]
  %s3 = inlined_call_operand.hbm [shape: f32[32,32], index: 3, kind: input, shape index: {}]
  %s4 = inlined_call_operand.hbm [shape: f32[32,32], index: 4, kind: input, shape index: {}]
  %s5 = inlined_call_operand.vmem [shape: f32[1,32], index: 5, kind: input, shape index: {}]
  %s6 = inlined_call_operand.vmem [shape: f32[1,32], index: 6, kind: input, shape index: {}]
  %s7 = inlined_call_operand.hbm [shape: f32[1,32], index: 7, kind: input, shape index: {}]
  %s8 = inlined_call_operand.hbm [shape: f32[16,32], index: 8, kind: output, shape index: {}]
  %s9 = sld [smem:[#allocation0]]
  $region85: #{attention_forward.1} parent=0
    _
  %s11 = ssub.s32 1, %s9
  %s12 = scalar_select 0, %s11, %s9
  $region1: #{attention_forward.1} parent=0
    #allocation2 [shape = 'u8[8192]{0}', space=vmem, size = 0x2000, scoped, tag = 'input window, operand 0']
    #allocation3 [shape = 's32[2]{0}', space=sflag, size = 0x8, scoped, tag = 'scoped memory for attention_forward.1']
    #allocation4 [shape = 's32[2]{0}', space=sflag, size = 0x8, scoped, tag = 'scoped memory for attention_forward.1']
    #allocation5 [shape = 'u8[16384]{0}', space=vmem, size = 0x4000, scoped, tag = 'input window, operand 1, single buffered']
    #allocation6 [shape = 's32[1]{0}', space=sflag, size = 0x4, scoped, tag = 'scoped memory for attention_forward.1']
    #allocation7 [shape = 'u8[16384]{0}', space=vmem, size = 0x4000, scoped, tag = 'input window, operand 3, single buffered']
    #allocation8 [shape = 'u8[16384]{0}', space=vmem, size = 0x4000, scoped, tag = 'input window, operand 4, single buffered']
    #allocation9 [shape = 's32[1]{0}', space=sflag, size = 0x4, scoped, tag = 'scoped memory for attention_forward.1']
    #allocation10 [shape = 'u8[512]{0}', space=vmem, size = 0x400, scoped, tag = 'input window, operand 7, single buffered']
    #allocation11 [shape = 'u8[8192]{0}', space=vmem, size = 0x2000, scoped, tag = 'output window, operand 0']
    %13 = vsyncpa [#allocation3], 0
    %s14 = scalar_lea.sflag [#allocation3], 1
    %15 = vsyncpa %s14, 0
    %16 = vsyncpa [#allocation6], 0
    %17 = vsyncpa [#allocation9], 0
    %18 = vsyncpa [#allocation4], 0
    %s19 = scalar_lea.sflag [#allocation4], 1
    %20 = vsyncpa %s19, 0
    loop: start=0, step=1, limit=4
    $region2: #{attention_forward.1} parent=1 // loop_pre_header
      _
    $region3: #{attention_forward.1} parent=1 // loop_header
      %s22 = sphi 0, %s26
      %p23 = scmp.ge.s32.totalorder %s22, 4
      %s32 = sphi 0, %s34
      %s35 = sphi 0, %s32
      %s36 = sphi 0, %s35
      %s52 = sphi 0, %s36
      %s56 = sphi 0, %s56
      %s58 = sphi 0, %s56
      %s59 = sphi 0, %s58
      %s73 = sphi 0, %s59
      %s77 = sphi 0, %s77
      %s79 = sphi 0, %s77
      %s80 = sphi 0, %s79
      %s94 = sphi 0, %s80
      %s98 = sphi 0, %s98
      %s100 = sphi 0, %s98
      %s101 = sphi 0, %s100
      %s115 = sphi 0, %s101
      %s119 = sphi 0, %s119
      %s121 = sphi 0, %s119
      %s122 = sphi 0, %s121
      %s136 = sphi 0, %s122
      %s140 = sphi 0, %s140
      %s142 = sphi 0, %s140
      %s143 = sphi 0, %s142
      %s157 = sphi 0, %s143
      %s161 = sphi 0, %s161
      %s163 = sphi 0, %s161
      %s164 = sphi 0, %s163
      %s178 = sphi 0, %s164
      %s182 = sphi 0, %s182
      %s184 = sphi 0, %s182
      %s185 = sphi 0, %s184
      %s199 = sphi 0, %s185
      %s205 = sphi 0, %s207
      %s208 = sphi 0, %s205
      %s209 = sphi 0, %s208
      %s225 = sphi 0, %s209
    $region4: #{attention_forward.1} parent=1 // loop_header_branch
      %25 = sbr.rel (%p23) target = $region8
    $region5: #{attention_forward.1} parent=1 // loop_body
      %s27 = ssub.s32 %s22, 1
      %s28 = ssub.s32 %s22, 2
      %s29 = sadd.s32 %s22, 1
      %s30 = ssub.s32 %s22, %s29
      %p31 = scmp.eq.s32.totalorder %s30, 0
      %s33 = sadd.s32 %s32, 1
      %s34 = scalar_select %p31, %s32, %s33
      %p37 = pneg %p31
      %p38 = scmp.eq.s32.totalorder %s22, 1
      %p39 = por %p37, %p38
      %p40 = scmp.ne.s32.totalorder %s32, %s35
      %p41 = scmp.eq.s32.totalorder %s22, 0
      %p42 = por %p40, %p41
      %p43 = scmp.ne.s32.totalorder %s32, %s35
      %p44 = scmp.eq.s32.totalorder %s27, 1
      %p45 = por %p43, %p44
      %p46 = scmp.ne.s32.totalorder %s35, %s36
      %p47 = scmp.eq.s32.totalorder %s27, 0
      %p48 = por %p46, %p47
      %p49 = scmp.ne.s32.totalorder %s35, %s36
      %p50 = scmp.eq.s32.totalorder %s28, 1
      %p51 = por %p49, %p50
      %p53 = scmp.ne.s32.totalorder %s36, %s52
      %p54 = scmp.eq.s32.totalorder %s28, 0
      %p55 = por %p53, %p54
      %s57 = sadd.s32 %s56, 1
      %p60 = scmp.eq.s32.totalorder %s22, 1
      %p61 = scmp.ne.s32.totalorder %s56, %s58
      %p62 = scmp.eq.s32.totalorder %s22, 0
      %p63 = por %p61, %p62
      %p64 = scmp.ne.s32.totalorder %s56, %s58
      %p65 = scmp.eq.s32.totalorder %s27, 1
      %p66 = por %p64, %p65
      %p67 = scmp.ne.s32.totalorder %s58, %s59
      %p68 = scmp.eq.s32.totalorder %s27, 0
      %p69 = por %p67, %p68
      %p70 = scmp.ne.s32.totalorder %s58, %s59
      %p71 = scmp.eq.s32.totalorder %s28, 1
      %p72 = por %p70, %p71
      %p74 = scmp.ne.s32.totalorder %s59, %s73
      %p75 = scmp.eq.s32.totalorder %s28, 0
      %p76 = por %p74, %p75
      %s78 = sadd.s32 %s77, 1
      %p81 = scmp.eq.s32.totalorder %s22, 1
      %p82 = scmp.ne.s32.totalorder %s77, %s79
      %p83 = scmp.eq.s32.totalorder %s22, 0
      %p84 = por %p82, %p83
      %p85 = scmp.ne.s32.totalorder %s77, %s79
      %p86 = scmp.eq.s32.totalorder %s27, 1
      %p87 = por %p85, %p86
      %p88 = scmp.ne.s32.totalorder %s79, %s80
      %p89 = scmp.eq.s32.totalorder %s27, 0
      %p90 = por %p88, %p89
      %p91 = scmp.ne.s32.totalorder %s79, %s80
      %p92 = scmp.eq.s32.totalorder %s28, 1
      %p93 = por %p91, %p92
      %p95 = scmp.ne.s32.totalorder %s80, %s94
      %p96 = scmp.eq.s32.totalorder %s28, 0
      %p97 = por %p95, %p96
      %s99 = sadd.s32 %s98, 1
      %p102 = scmp.eq.s32.totalorder %s22, 1
      %p103 = scmp.ne.s32.totalorder %s98, %s100
      %p104 = scmp.eq.s32.totalorder %s22, 0
      %p105 = por %p103, %p104
      %p106 = scmp.ne.s32.totalorder %s98, %s100
      %p107 = scmp.eq.s32.totalorder %s27, 1
      %p108 = por %p106, %p107
      %p109 = scmp.ne.s32.totalorder %s100, %s101
      %p110 = scmp.eq.s32.totalorder %s27, 0
      %p111 = por %p109, %p110
      %p112 = scmp.ne.s32.totalorder %s100, %s101
      %p113 = scmp.eq.s32.totalorder %s28, 1
      %p114 = por %p112, %p113
      %p116 = scmp.ne.s32.totalorder %s101, %s115
      %p117 = scmp.eq.s32.totalorder %s28, 0
      %p118 = por %p116, %p117
      %s120 = sadd.s32 %s119, 1
      %p123 = scmp.eq.s32.totalorder %s22, 1
      %p124 = scmp.ne.s32.totalorder %s119, %s121
      %p125 = scmp.eq.s32.totalorder %s22, 0
      %p126 = por %p124, %p125
      %p127 = scmp.ne.s32.totalorder %s119, %s121
      %p128 = scmp.eq.s32.totalorder %s27, 1
      %p129 = por %p127, %p128
      %p130 = scmp.ne.s32.totalorder %s121, %s122
      %p131 = scmp.eq.s32.totalorder %s27, 0
      %p132 = por %p130, %p131
      %p133 = scmp.ne.s32.totalorder %s121, %s122
      %p134 = scmp.eq.s32.totalorder %s28, 1
      %p135 = por %p133, %p134
      %p137 = scmp.ne.s32.totalorder %s122, %s136
      %p138 = scmp.eq.s32.totalorder %s28, 0
      %p139 = por %p137, %p138
      %s141 = sadd.s32 %s140, 1
      %p144 = scmp.eq.s32.totalorder %s22, 1
      %p145 = scmp.ne.s32.totalorder %s140, %s142
      %p146 = scmp.eq.s32.totalorder %s22, 0
      %p147 = por %p145, %p146
      %p148 = scmp.ne.s32.totalorder %s140, %s142
      %p149 = scmp.eq.s32.totalorder %s27, 1
      %p150 = por %p148, %p149
      %p151 = scmp.ne.s32.totalorder %s142, %s143
      %p152 = scmp.eq.s32.totalorder %s27, 0
      %p153 = por %p151, %p152
      %p154 = scmp.ne.s32.totalorder %s142, %s143
      %p155 = scmp.eq.s32.totalorder %s28, 1
      %p156 = por %p154, %p155
      %p158 = scmp.ne.s32.totalorder %s143, %s157
      %p159 = scmp.eq.s32.totalorder %s28, 0
      %p160 = por %p158, %p159
      %s162 = sadd.s32 %s161, 1
      %p165 = scmp.eq.s32.totalorder %s22, 1
      %p166 = scmp.ne.s32.totalorder %s161, %s163
      %p167 = scmp.eq.s32.totalorder %s22, 0
      %p168 = por %p166, %p167
      %p169 = scmp.ne.s32.totalorder %s161, %s163
      %p170 = scmp.eq.s32.totalorder %s27, 1
      %p171 = por %p169, %p170
      %p172 = scmp.ne.s32.totalorder %s163, %s164
      %p173 = scmp.eq.s32.totalorder %s27, 0
      %p174 = por %p172, %p173
      %p175 = scmp.ne.s32.totalorder %s163, %s164
      %p176 = scmp.eq.s32.totalorder %s28, 1
      %p177 = por %p175, %p176
      %p179 = scmp.ne.s32.totalorder %s164, %s178
      %p180 = scmp.eq.s32.totalorder %s28, 0
      %p181 = por %p179, %p180
      %s183 = sadd.s32 %s182, 1
      %p186 = scmp.eq.s32.totalorder %s22, 1
      %p187 = scmp.ne.s32.totalorder %s182, %s184
      %p188 = scmp.eq.s32.totalorder %s22, 0
      %p189 = por %p187, %p188
      %p190 = scmp.ne.s32.totalorder %s182, %s184
      %p191 = scmp.eq.s32.totalorder %s27, 1
      %p192 = por %p190, %p191
      %p193 = scmp.ne.s32.totalorder %s184, %s185
      %p194 = scmp.eq.s32.totalorder %s27, 0
      %p195 = por %p193, %p194
      %p196 = scmp.ne.s32.totalorder %s184, %s185
      %p197 = scmp.eq.s32.totalorder %s28, 1
      %p198 = por %p196, %p197
      %p200 = scmp.ne.s32.totalorder %s185, %s199
      %p201 = scmp.eq.s32.totalorder %s28, 0
      %p202 = por %p200, %p201
      %s203 = ssub.s32 %s22, %s29
      %p204 = scmp.eq.s32.totalorder %s203, 0
      %s206 = sadd.s32 %s205, 1
      %s207 = scalar_select %p204, %s205, %s206
      %p210 = pneg %p204
      %p211 = scmp.eq.s32.totalorder %s22, 1
      %p212 = por %p210, %p211
      %p213 = scmp.ne.s32.totalorder %s205, %s208
      %p214 = scmp.eq.s32.totalorder %s22, 0
      %p215 = por %p213, %p214
      %p216 = scmp.ne.s32.totalorder %s205, %s208
      %p217 = scmp.eq.s32.totalorder %s27, 1
      %p218 = por %p216, %p217
      %p219 = scmp.ne.s32.totalorder %s208, %s209
      %p220 = scmp.eq.s32.totalorder %s27, 0
      %p221 = por %p219, %p220
      %p222 = scmp.ne.s32.totalorder %s208, %s209
      %p223 = scmp.eq.s32.totalorder %s28, 1
      %p224 = por %p222, %p223
      %p226 = scmp.ne.s32.totalorder %s209, %s225
      %p227 = scmp.eq.s32.totalorder %s28, 0
      %p228 = por %p226, %p227
      %p229 = scmp.le.s32.totalorder 1, %s22
      %p230 = scmp.lt.s32.totalorder %s22, 3
      %p231 = pnand %p229, %p230
      %p232 = pneg %p231
      // Predicated region
      $region9: #{attention_forward.1} parent=5 // pred_check
        _
      $region10: #{attention_forward.1} parent=5 // pred_check_branch
        %234 = sbr.rel (%p231) target = $region12
      $region11: #{attention_forward.1} parent=5 // pred_region
        %s235 = ssub.s32 %s22, 1
        // Predicated region
        $region13: #{attention_forward.1} parent=11 // pred_check
          %p236 = pneg %p69
        $region14: #{attention_forward.1} parent=11 // pred_check_branch
          %238 = sbr.rel (%p236) target = $region16
        $region15: #{attention_forward.1} parent=11 // pred_region
          %240 = vsyncadd [#allocation6], 0
          %s241 = sshll.u32 %s1, 4
          %s242 = int_to_ptr.hbm [resolvable:$true] %s241
          %s243 = sshll.u32 [#allocation5], 4
          %s244 = int_to_ptr.vmem [resolvable:$true] %s243
          %249 = dma.hbm_to_vmem [thread:$0]  %s242, 512, %s244, [#allocation6], 128, 128, 8
        $region16: #{attention_forward.1} parent=11 // pred_fallthru
          _
        // Predicated region
        $region17: #{attention_forward.1} parent=11 // pred_check
          %p250 = pneg %p90
        $region18: #{attention_forward.1} parent=11 // pred_check_branch
          %252 = sbr.rel (%p250) target = $region20
        $region19: #{attention_forward.1} parent=11 // pred_region
          _
        $region20: #{attention_forward.1} parent=11 // pred_fallthru
          _
        // Predicated region
        $region21: #{attention_forward.1} parent=11 // pred_check
          %p253 = pneg %p111
        $region22: #{attention_forward.1} parent=11 // pred_check_branch
          %255 = sbr.rel (%p253) target = $region24
        $region23: #{attention_forward.1} parent=11 // pred_region
          %257 = vsyncadd [#allocation6], 0
          %s258 = sshll.u32 %s3, 4
          %s259 = int_to_ptr.hbm [resolvable:$true] %s258
          %s260 = sshll.u32 [#allocation7], 4
          %s261 = int_to_ptr.vmem [resolvable:$true] %s260
          %266 = dma.hbm_to_vmem [thread:$0]  %s259, 512, %s261, [#allocation6], 128, 128, 8
        $region24: #{attention_forward.1} parent=11 // pred_fallthru
          _
        // Predicated region
        $region25: #{attention_forward.1} parent=11 // pred_check
          %p267 = pneg %p132
        $region26: #{attention_forward.1} parent=11 // pred_check_branch
          %269 = sbr.rel (%p267) target = $region28
        $region27: #{attention_forward.1} parent=11 // pred_region
          %271 = vsyncadd [#allocation9], 0
          %s272 = sshll.u32 %s4, 4
          %s273 = int_to_ptr.hbm [resolvable:$true] %s272
          %s274 = sshll.u32 [#allocation8], 4
          %s275 = int_to_ptr.vmem [resolvable:$true] %s274
          %280 = dma.hbm_to_vmem [thread:$0]  %s273, 512, %s275, [#allocation9], 128, 128, 8
        $region28: #{attention_forward.1} parent=11 // pred_fallthru
          _
        // Predicated region
        $region29: #{attention_forward.1} parent=11 // pred_check
          %p281 = pneg %p153
        $region30: #{attention_forward.1} parent=11 // pred_check_branch
          %283 = sbr.rel (%p281) target = $region32
        $region31: #{attention_forward.1} parent=11 // pred_region
          _
        $region32: #{attention_forward.1} parent=11 // pred_fallthru
          _
        // Predicated region
        $region33: #{attention_forward.1} parent=11 // pred_check
          %p284 = pneg %p174
        $region34: #{attention_forward.1} parent=11 // pred_check_branch
          %286 = sbr.rel (%p284) target = $region36
        $region35: #{attention_forward.1} parent=11 // pred_region
          _
        $region36: #{attention_forward.1} parent=11 // pred_fallthru
          _
        // Predicated region
        $region37: #{attention_forward.1} parent=11 // pred_check
          %p287 = pneg %p195
        $region38: #{attention_forward.1} parent=11 // pred_check_branch
          %289 = sbr.rel (%p287) target = $region40
        $region39: #{attention_forward.1} parent=11 // pred_region
          %291 = vsyncadd [#allocation9], 0
          %s293 = sshll.u32 %s7, 4
          %s294 = int_to_ptr.hbm [resolvable:$true] %s293
          %s295 = sshll.u32 [#allocation10], 4
          %s296 = int_to_ptr.vmem [resolvable:$true] %s295
          %298 = dma.hbm_to_vmem [thread:$0]  %s294, 16, %s296, [#allocation9]
        $region40: #{attention_forward.1} parent=11 // pred_fallthru
          _
      $region12: #{attention_forward.1} parent=5 // pred_fallthru
        _
      %p299 = scmp.lt.s32.totalorder %s22, 2
      // Predicated region
      $region41: #{attention_forward.1} parent=5 // pred_check
        %p300 = pneg %p299
      $region42: #{attention_forward.1} parent=5 // pred_check_branch
        %302 = sbr.rel (%p300) target = $region44
      $region43: #{attention_forward.1} parent=5 // pred_region
        // Predicated region
        $region45: #{attention_forward.1} parent=43 // pred_check
          %p303 = pneg %p42
        $region46: #{attention_forward.1} parent=43 // pred_check_branch
          %305 = sbr.rel (%p303) target = $region48
        $region47: #{attention_forward.1} parent=43 // pred_region
          %s306 = sand.u32 %s32, 1
          %s307 = scalar_lea.sflag [#allocation3], %s306
          %s308 = sand.u32 %s32, 1
          %s309 = smul.addr %s308, 8
          %s310 = scalar_lea.vmem [#allocation2], %s309
          %312 = vsyncadd %s307, 0
          %s313 = smul.addr %s22, 8
          %s314 = scalar_lea.hbm %s0, %s313
          %s316 = sshll.u32 %s314, 4
          %s317 = int_to_ptr.hbm [resolvable:$true] %s316
          %s318 = sshll.u32 %s310, 4
          %s319 = int_to_ptr.vmem [resolvable:$true] %s318
          %321 = dma.hbm_to_vmem [thread:$0]  %s317, 128, %s319, %s307
        $region48: #{attention_forward.1} parent=43 // pred_fallthru
          _
      $region44: #{attention_forward.1} parent=5 // pred_fallthru
        _
      %p322 = scmp.le.s32.totalorder 1, %s22
      %p323 = scmp.lt.s32.totalorder %s22, 3
      %p324 = pnand %p322, %p323
      %p325 = pneg %p324
      // Predicated region
      $region49: #{attention_forward.1} parent=5 // pred_check
        _
      $region50: #{attention_forward.1} parent=5 // pred_check_branch
        %327 = sbr.rel (%p324) target = $region52
      $region51: #{attention_forward.1} parent=5 // pred_region
        %s328 = ssub.s32 %s22, 1
        %s329 = sand.u32 %s35, 1
        %s330 = scalar_lea.sflag [#allocation3], %s329
        %s331 = sand.u32 %s35, 1
        %s332 = smul.addr %s331, 8
        %s333 = scalar_lea.vmem [#allocation2], %s332
        // Predicated region
        $region53: #{attention_forward.1} parent=51 // pred_check
          %p334 = pneg %p48
        $region54: #{attention_forward.1} parent=51 // pred_check_branch
          %336 = sbr.rel (%p334) target = $region56
        $region55: #{attention_forward.1} parent=51 // pred_region
          %338 = dma.done %s330, 128
        $region56: #{attention_forward.1} parent=51 // pred_fallthru
          _
        // Predicated region
        $region57: #{attention_forward.1} parent=51 // pred_check
          %p339 = pneg %p69
        $region58: #{attention_forward.1} parent=51 // pred_check_branch
          %341 = sbr.rel (%p339) target = $region60
        $region59: #{attention_forward.1} parent=51 // pred_region
          %343 = dma.done [#allocation6], 512
        $region60: #{attention_forward.1} parent=51 // pred_fallthru
          _
        // Predicated region
        $region61: #{attention_forward.1} parent=51 // pred_check
          %p344 = pneg %p111
        $region62: #{attention_forward.1} parent=51 // pred_check_branch
          %346 = sbr.rel (%p344) target = $region64
        $region63: #{attention_forward.1} parent=51 // pred_region
          %348 = dma.done [#allocation6], 512
        $region64: #{attention_forward.1} parent=51 // pred_fallthru
          _
        // Predicated region
        $region65: #{attention_forward.1} parent=51 // pred_check
          %p349 = pneg %p132
        $region66: #{attention_forward.1} parent=51 // pred_check_branch
          %351 = sbr.rel (%p349) target = $region68
        $region67: #{attention_forward.1} parent=51 // pred_region
          %353 = dma.done [#allocation9], 512
        $region68: #{attention_forward.1} parent=51 // pred_fallthru
          _
        // Predicated region
        $region69: #{attention_forward.1} parent=51 // pred_check
          %p354 = pneg %p195
        $region70: #{attention_forward.1} parent=51 // pred_check_branch
          %356 = sbr.rel (%p354) target = $region72
        $region71: #{attention_forward.1} parent=51 // pred_region
          %358 = dma.done [#allocation9], 16
        $region72: #{attention_forward.1} parent=51 // pred_fallthru
          _
        %s359 = sand.u32 %s35, 1
        %s360 = scalar_lea.sflag [#allocation3], %s359
        %s361 = sand.u32 %s35, 1
        %s362 = smul.addr %s361, 8
        %s363 = scalar_lea.vmem [#allocation2], %s362
        %p364 = pneg %p48
        %p365 = pneg %p45
        %p366 = pneg %p69
        %p367 = pneg %p66
        %p368 = pneg %p90
        %p369 = pneg %p87
        %p370 = pneg %p111
        %p371 = pneg %p108
        %p372 = pneg %p132
        %p373 = pneg %p129
        %p374 = pneg %p153
        %p375 = pneg %p150
        %p376 = pneg %p174
        %p377 = pneg %p171
        %p378 = pneg %p195
        %p379 = pneg %p192
        %p380 = pneg %p221
        %p381 = pneg %p218
        %s382 = sand.u32 %s208, 1
        %s383 = scalar_lea.sflag [#allocation4], %s382
        %s384 = sand.u32 %s208, 1
        %s385 = smul.addr %s384, 8
        %s386 = scalar_lea.vmem [#allocation11], %s385
        %v387 = vld [vmem:[%s333] sm:$0xff]
        %v388 = vld [vmem:[#allocation5] sm:$0xff]
        %v389 = vld [vmem:[#allocation5 + $0x8] sm:$0xff]
        %v390 = vld [vmem:[#allocation5 + $0x10] sm:$0xff]
        %v391 = vld [vmem:[#allocation5 + $0x18] sm:$0xff]
        %v392 = vld [vmem:[%s2] sm:$0x1]
        %v394 = vperm.slane %v392, 0
        %vm396 = vcmask 261120
        %v398 = vsel %vm396, %v387, 0
        %400 = vmatpush.msra.mxu0 0.0
        %401 = vmatpush.msra.mxu0 0.0
        %402 = vmatpush.msra.mxu0 0.0
        %403 = vmatpush.msra.mxu0 0.0
        %404 = vmatpush.msra.mxu0 0.0
        %405 = vmatpush.msra.mxu0 0.0
        %406 = vmatpush.msra.mxu0 0.0
        %407 = vmatpush.msra.mxu0 0.0
        %408 = vmatpush.msra.mxu0 0.0
        %409 = vmatpush.msra.mxu0 0.0
        %410 = vmatpush.msra.mxu0 0.0
        %411 = vmatpush.msra.mxu0 0.0
        %412 = vmatpush.msra.mxu0 %v391
        %413 = vmatpush.msra.mxu0 %v390
        %414 = vmatpush.msra.mxu0 %v389
        %415 = vmatpush.msra.mxu0 %v388
        %416 = vmatmul.f32.gmra.mxu0 %v398
        %v417 = vpop.f32.mrf.mxu0
        %v418 = vadd.f32 %v394, %v417
        %419 = vdwg.mxu0
        %v420 = vld [vmem:[#allocation7] sm:$0xff]
        %v421 = vld [vmem:[#allocation7 + $0x8] sm:$0xff]
        %v422 = vld [vmem:[#allocation7 + $0x10] sm:$0xff]
        %v423 = vld [vmem:[#allocation7 + $0x18] sm:$0xff]
        %428 = vrot.lane.b32.xlu0 %v420, 32
        %v429 = vpop.permute.xlu0 %428
        %430 = vrot.lane.b32.xlu0 %v421, 32
        %v431 = vpop.permute.xlu0 %430
        %432 = vrot.lane.b32.xlu0 %v422, 32
        %v433 = vpop.permute.xlu0 %432
        %434 = vrot.lane.b32.xlu0 %v423, 32
        %v435 = vpop.permute.xlu0 %434
        %v440 = vmul.f32 %v418, %v429
        %v441 = vmul.f32 %v418, %v431
        %v442 = vmul.f32 %v418, %v433
        %v443 = vmul.f32 %v418, %v435
        %444 = vrot.lane.b32.xlu0 %v420, 64
        %v445 = vpop.permute.xlu0 %444
        %446 = vrot.lane.b32.xlu0 %v421, 64
        %v447 = vpop.permute.xlu0 %446
        %448 = vrot.lane.b32.xlu0 %v422, 64
        %v449 = vpop.permute.xlu0 %448
        %450 = vrot.lane.b32.xlu0 %v423, 64
        %v451 = vpop.permute.xlu0 %450
        %v456 = vmul.f32 %v418, %v445
        %v457 = vmul.f32 %v418, %v447
        %v458 = vmul.f32 %v418, %v449
        %v459 = vmul.f32 %v418, %v451
        %464 = vrot.lane.b32.xlu0 %v440, 96
        %v465 = vpop.permute.xlu0 %464
        %466 = vrot.lane.b32.xlu0 %v441, 96
        %v467 = vpop.permute.xlu0 %466
        %468 = vrot.lane.b32.xlu0 %v442, 96
        %v469 = vpop.permute.xlu0 %468
        %470 = vrot.lane.b32.xlu0 %v443, 96
        %v471 = vpop.permute.xlu0 %470
        %v473 = vsel %vm396, %v418, 0
        %v475 = vsel %vm396, %v465, 0
        %v477 = vsel %vm396, %v467, 0
        %v479 = vsel %vm396, %v469, 0
        %v481 = vsel %vm396, %v471, 0
        %483 = vmatpush.xpose.msra.mxu0 0.0
        %484 = vmatpush.xpose.msra.mxu0 0.0
        %485 = vmatpush.xpose.msra.mxu0 0.0
        %486 = vmatpush.xpose.msra.mxu0 0.0
        %487 = vmatpush.xpose.msra.mxu0 0.0
        %488 = vmatpush.xpose.msra.mxu0 0.0
        %489 = vmatpush.xpose.msra.mxu0 0.0
        %490 = vmatpush.xpose.msra.mxu0 0.0
        %491 = vmatpush.xpose.msra.mxu0 0.0
        %492 = vmatpush.xpose.msra.mxu0 0.0
        %493 = vmatpush.xpose.msra.mxu0 0.0
        %494 = vmatpush.xpose.msra.mxu0 0.0
        %495 = vmatpush.xpose.msra.mxu0 %v481
        %496 = vmatpush.xpose.msra.mxu0 %v479
        %497 = vmatpush.xpose.msra.mxu0 %v477
        %498 = vmatpush.xpose.msra.mxu0 %v475
        %499 = vmatmul.f32.gmra.mxu0 %v473
        %v500 = vpop.f32.mrf.mxu0
        %v501 = vadd.f32 0.0, %v500
        %502 = vdwg.mxu0
        %v503 = vsel %vm396, %v501, -inf
        %504 = vmax.xlane.f32.xlu0 %v503
        %v505 = vpop.xlane.xlu0 %504
        %v506 = vsub.f32 %v501, %v505
        %v507 = vmul.f32 %v506, 1.442695
        %v508 = vpow.pop %v507
        %513 = vrot.lane.b32.xlu0 %v456, 64
        %v514 = vpop.permute.xlu0 %513
        %515 = vrot.lane.b32.xlu0 %v457, 64
        %v516 = vpop.permute.xlu0 %515
        %517 = vrot.lane.b32.xlu0 %v458, 64
        %v518 = vpop.permute.xlu0 %517
        %519 = vrot.lane.b32.xlu0 %v459, 64
        %v520 = vpop.permute.xlu0 %519
        %v526 = vsel %vm396, %v508, 0
        %528 = vmatpush.msra.mxu0 0.0
        %529 = vmatpush.msra.mxu0 0.0
        %530 = vmatpush.msra.mxu0 0.0
        %531 = vmatpush.msra.mxu0 0.0
        %532 = vmatpush.msra.mxu0 0.0
        %533 = vmatpush.msra.mxu0 0.0
        %534 = vmatpush.msra.mxu0 0.0
        %535 = vmatpush.msra.mxu0 0.0
        %536 = vmatpush.msra.mxu0 0.0
        %537 = vmatpush.msra.mxu0 0.0
        %538 = vmatpush.msra.mxu0 0.0
        %539 = vmatpush.msra.mxu0 0.0
        %540 = vmatpush.msra.mxu0 %v520
        %541 = vmatpush.msra.mxu0 %v518
        %542 = vmatpush.msra.mxu0 %v516
        %543 = vmatpush.msra.mxu0 %v514
        %544 = vmatmul.f32.gmra.mxu0 %v526
        %v545 = vpop.f32.mrf.mxu0
        %v546 = vadd.f32 0.0, %v545
        %547 = vdwg.mxu0
        %548 = vmatpush.msra.mxu0 0.0
        %549 = vmatpush.msra.mxu0 0.0
        %550 = vmatpush.msra.mxu0 0.0
        %551 = vmatpush.msra.mxu0 0.0
        %552 = vmatpush.msra.mxu0 0.0
        %553 = vmatpush.msra.mxu0 0.0
        %554 = vmatpush.msra.mxu0 0.0
        %555 = vmatpush.msra.mxu0 0.0
        %556 = vmatpush.msra.mxu0 0.0
        %557 = vmatpush.msra.mxu0 0.0
        %558 = vmatpush.msra.mxu0 0.0
        %559 = vmatpush.msra.mxu0 0.0
        %560 = vmatpush.msra.mxu0 %v423
        %561 = vmatpush.msra.mxu0 %v422
        %562 = vmatpush.msra.mxu0 %v421
        %563 = vmatpush.msra.mxu0 %v420
        %564 = vmatmul.f32.gmra.mxu0 %v526
        %v565 = vpop.f32.mrf.mxu0
        %v566 = vadd.f32 0.0, %v565
        %567 = vdwg.mxu0
        %v568 = vrcp.pop %v566
        %v569 = vmul.f32 %v566, %v568
        %v570 = vsub.f32 1.0, %v569
        %v571 = vmul.f32 %v568, %v570
        %v572 = vadd.f32 %v568, %v571
        %vm573 = vweird.f32 %v566
        %vm574 = vweird.f32 %v568
        %vm575 = vmor %vm573, %vm574
        %v576 = vsel %vm575, %v568, %v572
        %v577 = vand.u32 2147483647, %v566
        %vm578 = vcmp.eq.f32.partialorder %v577, 8.507059e+37
        %v579 = vand.u32 %v566, 2147483648
        %v580 = vor.u32 1.1754944e-38, %v579
        %v581 = vsel %vm578, %v580, %v576
        %v582 = vmul.f32 %v546, %v581
        %v583 = vld [vmem:[#allocation8] sm:$0xff]
        %v584 = vld [vmem:[#allocation8 + $0x8] sm:$0xff]
        %v585 = vld [vmem:[#allocation8 + $0x10] sm:$0xff]
        %v586 = vld [vmem:[#allocation8 + $0x18] sm:$0xff]
        %v587 = vld [vmem:[%s5] sm:$0x1]
        %v589 = vperm.slane %v587, 0
        %v592 = vsel %vm396, %v582, 0
        %594 = vmatpush.msra.mxu0 0.0
        %595 = vmatpush.msra.mxu0 0.0
        %596 = vmatpush.msra.mxu0 0.0
        %597 = vmatpush.msra.mxu0 0.0
        %598 = vmatpush.msra.mxu0 0.0
        %599 = vmatpush.msra.mxu0 0.0
        %600 = vmatpush.msra.mxu0 0.0
        %601 = vmatpush.msra.mxu0 0.0
        %602 = vmatpush.msra.mxu0 0.0
        %603 = vmatpush.msra.mxu0 0.0
        %604 = vmatpush.msra.mxu0 0.0
        %605 = vmatpush.msra.mxu0 0.0
        %606 = vmatpush.msra.mxu0 %v586
        %607 = vmatpush.msra.mxu0 %v585
        %608 = vmatpush.msra.mxu0 %v584
        %609 = vmatpush.msra.mxu0 %v583
        %610 = vmatmul.f32.gmra.mxu0 %v592
        %v611 = vpop.f32.mrf.mxu0
        %v612 = vadd.f32 %v589, %v611
        %613 = vdwg.mxu0
        %v614 = vadd.f32 %v612, %v387
        %v615 = vsel %vm396, %v614, 0.0
        %616 = vadd.xlane.f32.xlu0 %v615
        %v617 = vpop.xlane.xlu0 %616
        %v618 = vrcp.pop 32.0
        %v619 = vmul.f32 32.0, %v618
        %v620 = vsub.f32 1.0, %v619
        %v621 = vmul.f32 %v618, %v620
        %v622 = vadd.f32 %v618, %v621
        %vm623 = vweird.f32 %v618
        %v624 = vsel %vm623, %v618, %v622
        %v625 = vmul.f32 %v617, %v624
        %v626 = vsub.f32 %v614, %v625
        %v627 = vmul.f32 %v626, %v626
        %v628 = vsel %vm396, %v627, 0.0
        %629 = vadd.xlane.f32.xlu0 %v628
        %v630 = vpop.xlane.xlu0 %629
        %v631 = vmul.f32 %v630, %v624
        %v632 = vadd.f32 %v631, 1e-05
        %v633 = vrsqrt.pop %v632
        %v634 = vmul.f32 %v633, %v632
        %v635 = vmul.f32 %v634, %v633
        %v636 = vmul.f32 0.5, %v635
        %v637 = vsub.f32 1.5, %v636
        %v638 = vmul.f32 %v633, %v637
        %vm639 = vweird.f32 %v632
        %vm640 = vweird.f32 %v633
        %vm641 = vmor %vm639, %vm640
        %v642 = vsel %vm641, %v633, %v638
        %v643 = vmul.f32 %v626, %v642
        %v644 = vld [vmem:[%s6] sm:$0x1]
        %v646 = vperm.slane %v644, 0
        %v648 = vmul.f32 %v643, %v646
        %v649 = vld [vmem:[#allocation10] sm:$0x1]
        %v651 = vperm.slane %v649, 0
        %v653 = vadd.f32 %v648, %v651
        %654 = vst.msk [vmem:[%s386] sm:$0xff] %vm396, %v653
        %s655 = sand.u32 %s208, 1
        %s656 = scalar_lea.sflag [#allocation4], %s655
        %s657 = sand.u32 %s208, 1
        %s658 = smul.addr %s657, 8
        %s659 = scalar_lea.vmem [#allocation11], %s658
        // Predicated region
        $region73: #{attention_forward.1} parent=51 // pred_check
          %p660 = pneg %p218
        $region74: #{attention_forward.1} parent=51 // pred_check_branch
          %662 = sbr.rel (%p660) target = $region76
        $region75: #{attention_forward.1} parent=51 // pred_region
          %664 = vsyncadd %s656, 0
          %s665 = smul.addr %s27, 8
          %s666 = scalar_lea.hbm %s8, %s665
          %s668 = sshll.u32 %s659, 4
          %s669 = int_to_ptr.vmem [resolvable:$true] %s668
          %s670 = sshll.u32 %s666, 4
          %s671 = int_to_ptr.hbm [resolvable:$true] %s670
          %673 = dma.vmem_to_hbm [thread:$0]  %s669, 128, %s671, %s656
        $region76: #{attention_forward.1} parent=51 // pred_fallthru
          _
      $region52: #{attention_forward.1} parent=5 // pred_fallthru
        _
      %p674 = scmp.le.s32.totalorder 2, %s22
      // Predicated region
      $region77: #{attention_forward.1} parent=5 // pred_check
        %p675 = pneg %p674
      $region78: #{attention_forward.1} parent=5 // pred_check_branch
        %677 = sbr.rel (%p675) target = $region80
      $region79: #{attention_forward.1} parent=5 // pred_region
        %s678 = ssub.s32 %s22, 2
        // Predicated region
        $region81: #{attention_forward.1} parent=79 // pred_check
          %p679 = pneg %p224
        $region82: #{attention_forward.1} parent=79 // pred_check_branch
          %681 = sbr.rel (%p679) target = $region84
        $region83: #{attention_forward.1} parent=79 // pred_region
          %s682 = sand.u32 %s209, 1
          %s683 = scalar_lea.sflag [#allocation4], %s682
          %s684 = sand.u32 %s209, 1
          %s685 = smul.addr %s684, 8
          %s686 = scalar_lea.vmem [#allocation11], %s685
          %688 = dma.done %s683, 128
        $region84: #{attention_forward.1} parent=79 // pred_fallthru
          _
      $region80: #{attention_forward.1} parent=5 // pred_fallthru
        _
    $region6: #{attention_forward.1} parent=1 // loop_footer
      %s26 = sadd.s32 1, %s22
    $region7: #{attention_forward.1} parent=1 // loop_footer_branch
      %21 = sbr.rel target = $region3
    $region8: #{attention_forward.1} parent=1 // loop_exit
      _
    %689 = vsyncpa [#allocation3], 1
    %s690 = scalar_lea.sflag [#allocation3], 1
    %691 = vsyncpa %s690, 1
    %692 = vsyncpa [#allocation6], 1
    %693 = vsyncpa [#allocation9], 1
    %694 = vsyncpa [#allocation4], 1
    %s695 = scalar_lea.sflag [#allocation4], 1
    %696 = vsyncpa %s695, 1

</llo_original>
